<compile_context>
chip_gen: v6e
topology: v6e:2x2x1
jax: 0.10.0
libtpu: 0.0.40
codegen_flags: <defaults>
</compile_context>

<pallas_src>
import jax
import jax.numpy as jnp
from jax.experimental import pallas as pl
from jax.experimental.pallas import tpu as pltpu


def _round_up(x, m):
    return ((x + m - 1) // m) * m


def _pad2d(x, rows, cols):
    r, c = x.shape
    if r == rows and c == cols:
        return x
    return jnp.pad(x, ((0, rows - r), (0, cols - c)))


def _vmem_limit_bytes():
    """Per-generation scoped-VMEM budget: physical capacity minus headroom, capped."""
    cap = 64 * 1024 * 1024  # conservative fallback (v7x per-TC VMEM)
    try:
        cap = int(pltpu.get_tpu_info().vmem_capacity_bytes)
    except Exception:
        pass
    # ~8 MiB headroom for Mosaic internal scratch; cap at 100 MiB on 128 MiB chips.
    return int(max(32 * 1024 * 1024, min(100 * 1024 * 1024, cap - 8 * 1024 * 1024)))


# ----------------------- whole-array (no grid) kernels: small N -----------------------
def _whole_direct_kernel(inp_ref, x1_ref, x2_ref, out_ref):
    inp = inp_ref[...]
    t1 = jnp.dot(inp, inp, preferred_element_type=jnp.float32)            # MXU
    v1 = t1 + x1_ref[...]                                                 # VPU
    out_ref[...] = jnp.dot(
        v1, x2_ref[...], preferred_element_type=jnp.float32
    ).astype(out_ref.dtype)                                               # MXU, lane-dense store


def _whole_reassoc_kernel(inp_ref, x1_ref, x2_ref, out_ref):
    # (inp@inp + x1) @ x2 == inp @ (inp @ x2) + x1 @ x2   (fewer FLOPs when M << N)
    inp = inp_ref[...]
    x2 = x2_ref[...]
    w = jnp.dot(inp, x2, preferred_element_type=jnp.float32)
    out_ref[...] = (
        jnp.dot(inp, w, preferred_element_type=jnp.float32)
        + jnp.dot(x1_ref[...], x2, preferred_element_type=jnp.float32)
    ).astype(out_ref.dtype)


def _forward_whole(inp_p, x1_p, x2_p, reassociate):
    Np = inp_p.shape[0]
    Mp = x2_p.shape[1]
    flops = 6 * Np * Np * Mp if reassociate else 2 * Np**3 + 2 * Np * Np * Mp
    bytes_accessed = 4 * (2 * Np * Np + 2 * Np * Mp)
    kern = _whole_reassoc_kernel if reassociate else _whole_direct_kernel
    return pl.pallas_call(
        kern,
        out_shape=jax.ShapeDtypeStruct((Np, Mp), jnp.float32),
        in_specs=[
            pl.BlockSpec(memory_space=pltpu.MemorySpace.VMEM),  # inp
            pl.BlockSpec(memory_space=pltpu.MemorySpace.VMEM),  # x1
            pl.BlockSpec(memory_space=pltpu.MemorySpace.VMEM),  # x2
        ],
        out_specs=pl.BlockSpec(memory_space=pltpu.MemorySpace.VMEM),
        compiler_params=pltpu.CompilerParams(vmem_limit_bytes=_vmem_limit_bytes()),
        cost_estimate=pl.CostEstimate(
            flops=flops, transcendentals=0, bytes_accessed=bytes_accessed
        ),
    )(inp_p, x1_p, x2_p)


# -------------------- row-tiled, reassociated path (large N, M << N) --------------------
def _w_rowtile_kernel(inp_row_ref, x2_ref, w_ref):
    # w_rows = inp_rows @ x2
    w_ref[...] = jnp.dot(
        inp_row_ref[...], x2_ref[...], preferred_element_type=jnp.float32
    )


def _reassoc_rowtile_kernel(inp_row_ref, x1_row_ref, w_ref, x2_ref, out_ref):
    # out_rows = inp_rows @ w + x1_rows @ x2
    a = jnp.dot(inp_row_ref[...], w_ref[...], preferred_element_type=jnp.float32)
    b = jnp.dot(x1_row_ref[...], x2_ref[...], preferred_element_type=jnp.float32)
    out_ref[...] = (a + b).astype(out_ref.dtype)


def _forward_rowtiled_reassoc(inp_p, x1_p, x2_p, row_tile):
    Np = inp_p.shape[0]
    Mp = x2_p.shape[1]
    grid = (Np // row_tile,)
    params = pltpu.CompilerParams(
        dimension_semantics=("parallel",),  # TODO(synk): pltpu.CORE_PARALLEL on v7x (2 TCs)
        vmem_limit_bytes=_vmem_limit_bytes(),
    )
    # Pass 1: w = inp @ x2  (inp rows streamed, skinny x2 resident).
    w = pl.pallas_call(
        _w_rowtile_kernel,
        out_shape=jax.ShapeDtypeStruct((Np, Mp), jnp.float32),
        grid_spec=pltpu.PrefetchScalarGridSpec(
            num_scalar_prefetch=0,
            grid=grid,
            in_specs=[
                pl.BlockSpec((row_tile, Np), lambda i: (i, 0)),  # inp rows
                pl.BlockSpec((Np, Mp), lambda i: (0, 0)),        # x2 (resident, skinny)
            ],
            out_specs=pl.BlockSpec((row_tile, Mp), lambda i: (i, 0)),
        ),
        compiler_params=params,
        cost_estimate=pl.CostEstimate(
            flops=2 * Np * Np * Mp, transcendentals=0,
            bytes_accessed=4 * (Np * Np + 2 * Np * Mp),
        ),
    )(inp_p, x2_p)

    # Pass 2: out = inp @ w + x1 @ x2  (rows streamed; w and x2 resident, both skinny).
    return pl.pallas_call(
        _reassoc_rowtile_kernel,
        out_shape=jax.ShapeDtypeStruct((Np, Mp), jnp.float32),
        grid_spec=pltpu.PrefetchScalarGridSpec(
            num_scalar_prefetch=0,
            grid=grid,
            in_specs=[
                pl.BlockSpec((row_tile, Np), lambda i: (i, 0)),  # inp rows
                pl.BlockSpec((row_tile, Np), lambda i: (i, 0)),  # x1 rows
                pl.BlockSpec((Np, Mp), lambda i: (0, 0)),        # w (resident, skinny)
                pl.BlockSpec((Np, Mp), lambda i: (0, 0)),        # x2 (resident, skinny)
            ],
            out_specs=pl.BlockSpec((row_tile, Mp), lambda i: (i, 0)),
        ),
        compiler_params=params,
        cost_estimate=pl.CostEstimate(
            flops=4 * Np * Np * Mp, transcendentals=0,
            bytes_accessed=4 * (2 * Np * Np + 3 * Np * Mp),
        ),
    )(inp_p, x1_p, w, x2_p)


# ------------------ row-tiled, direct fallback (large N and M ~ N) ------------------
def _direct_rowtile_kernel(x1_row_ref, inp_full_ref, x2_ref, out_ref):
    row_tile = out_ref.shape[0]
    start = pl.multiple_of(pl.program_id(0) * row_tile, row_tile)
    inp_rows = inp_full_ref[pl.ds(start, row_tile), :]  # LHS rows from the resident copy
    t1 = jnp.dot(inp_rows, inp_full_ref[...], preferred_element_type=jnp.float32)
    v1 = t1 + x1_row_ref[...]
    out_ref[...] = jnp.dot(
        v1, x2_ref[...], preferred_element_type=jnp.float32
    ).astype(out_ref.dtype)


def _forward_rowtiled_direct(inp_p, x1_p, x2_p, row_tile):
    Np = inp_p.shape[0]
    Mp = x2_p.shape[1]
    grid = (Np // row_tile,)
    # TODO(synk): resident inp/x2 stay default double-buffered here (safe everywhere);
    # single-buffer them (pl.Buffered(1) or ANY+VMEM scratch) and K-tile the RHS once
    # N*N*4 bytes nears the budget (N >~ 2.2k on v7x's 64 MiB, ~4-5k on v5e/v6e).
    return pl.pallas_call(
        _direct_rowtile_kernel,
        out_shape=jax.ShapeDtypeStruct((Np, Mp), jnp.float32),
        grid_spec=pltpu.PrefetchScalarGridSpec(
            num_scalar_prefetch=0,
            grid=grid,
            in_specs=[
                pl.BlockSpec((row_tile, Np), lambda i: (i, 0)),  # x1 rows (streamed)
                pl.BlockSpec((Np, Np), lambda i: (0, 0)),        # full inp (resident RHS+LHS)
                pl.BlockSpec((Np, Mp), lambda i: (0, 0)),        # full x2 (resident)
            ],
            out_specs=pl.BlockSpec((row_tile, Mp), lambda i: (i, 0)),
        ),
        compiler_params=pltpu.CompilerParams(
            dimension_semantics=("parallel",),  # TODO(synk): pltpu.CORE_PARALLEL on v7x
            vmem_limit_bytes=_vmem_limit_bytes(),
        ),
        cost_estimate=pl.CostEstimate(
            flops=2 * Np**3 + 2 * Np * Np * Mp, transcendentals=0,
            bytes_accessed=4 * (2 * Np * Np + 2 * Np * Mp),
        ),
    )(x1_p, inp_p, x2_p)


# ------------------------------------ public wrapper ------------------------------------
def model_forward(x1, x2, inp, *, simple_n_limit=512):
    N, N2 = inp.shape
    assert N == N2, "inp must be square for mm(inp, inp)"
    assert x1.shape == (N, N)
    assert x2.shape[0] == N
    M = x2.shape[1]

    # Lane-dense output: pad M up to a multiple of 128 (zero columns -> zero outputs).
    Mp = _round_up(max(M, 128), 128)

    use_simple = N <= simple_n_limit
    if use_simple:
        # 128-align K once it is big enough to fill lanes; otherwise sublane alignment.
        Np = _round_up(N, 128) if N >= 128 else _round_up(max(N, 8), 8)
        row_tile = None
    else:
        Np = _round_up(N, 128)
        row_tile = 256 if Np % 256 == 0 else 128

    inp_p = _pad2d(inp.astype(jnp.float32), Np, Np)
    x1_p = _pad2d(x1.astype(jnp.float32), Np, Np)
    x2_p = _pad2d(x2.astype(jnp.float32), Np, Mp)

    # Reassociate when output width is much smaller than N (6*N^2*M vs 2*N^3+2*N^2*M).
    reassociate = (2 * Mp) < Np

    if use_simple:
        out_p = _forward_whole(inp_p, x1_p, x2_p, reassociate)
    elif reassociate:
        out_p = _forward_rowtiled_reassoc(inp_p, x1_p, x2_p, row_tile)
    else:
        out_p = _forward_rowtiled_direct(inp_p, x1_p, x2_p, row_tile)

    return out_p[:N, :M]


def model_forward_ref(x1, x2, inp):
    hp = jax.lax.Precision.HIGHEST
    t1 = jnp.dot(inp, inp, precision=hp)
    v1 = t1 + x1
    return jnp.dot(v1, x2, precision=hp)


if __name__ == "__main__":
    key = jax.random.PRNGKey(0)
    ks = jax.random.split(key, 12)

    # --- 1) small, module-like shapes: whole-array direct path ---
    N, M = 32, 16
    inp = jax.random.normal(ks[0], (N, N), dtype=jnp.float32)
    x1 = jax.random.normal(ks[1], (N, N), dtype=jnp.float32)
    x2 = jax.random.normal(ks[2], (N, M), dtype=jnp.float32)
    out = jax.block_until_ready(model_forward(x1, x2, inp))
    ref = model_forward_ref(x1, x2, inp)
    assert out.shape == (N, M)
    assert jnp.allclose(out, ref, atol=1e-3, rtol=1e-3), "whole/direct path mismatch"

    # --- 2) whole-array reassociated path (M << N, N still small) ---
    Nb, Mb = 384, 8
    inpb = jax.random.normal(ks[3], (Nb, Nb), dtype=jnp.float32)
    x1b = jax.random.normal(ks[4], (Nb, Nb), dtype=jnp.float32)
    x2b = jax.random.normal(ks[5], (Nb, Mb), dtype=jnp.float32)
    outb = jax.block_until_ready(model_forward(x1b, x2b, inpb))
    refb = model_forward_ref(x1b, x2b, inpb)
    assert outb.shape == (Nb, Mb)
    assert jnp.allclose(outb, refb, atol=2e-2, rtol=2e-3), "whole/reassoc path mismatch"

    # --- 3) row-tiled reassociated path (forced via simple_n_limit=0), ragged shapes ---
    Nc, Mc = 300, 24
    inpc = jax.random.normal(ks[6], (Nc, Nc), dtype=jnp.float32)
    x1c = jax.random.normal(ks[7], (Nc, Nc), dtype=jnp.float32)
    x2c = jax.random.normal(ks[8], (Nc, Mc), dtype=jnp.float32)
    outc = jax.block_until_ready(model_forward(x1c, x2c, inpc, simple_n_limit=0))
    refc = model_forward_ref(x1c, x2c, inpc)
    assert outc.shape == (Nc, Mc)
    assert jnp.allclose(outc, refc, atol=2e-2, rtol=2e-3), "tiled/reassoc path mismatch"

    # --- 4) row-tiled direct fallback (wide x2, forced via simple_n_limit=0) ---
    Nd, Md = 256, 200
    inpd = jax.random.normal(ks[9], (Nd, Nd), dtype=jnp.float32)
    x1d = jax.random.normal(ks[10], (Nd, Nd), dtype=jnp.float32)
    x2d = jax.random.normal(ks[11], (Nd, Md), dtype=jnp.float32)
    outd = jax.block_until_ready(model_forward(x1d, x2d, inpd, simple_n_limit=0))
    refd = model_forward_ref(x1d, x2d, inpd)
    assert outd.shape == (Nd, Md)
    assert jnp.allclose(outd, refd, atol=2e-2, rtol=2e-3), "tiled/direct path mismatch"

    print("KERNEL_OK")
</pallas_src>

<mosaic_0001>
module attributes {stable_mosaic.version = 11 : i64} {
  func.func @_whole_direct_kernel(%arg0: memref<32x32xf32, #tpu.memory_space<vmem>>, %arg1: memref<32x32xf32, #tpu.memory_space<vmem>>, %arg2: memref<32x128xf32, #tpu.memory_space<vmem>>, %arg3: memref<32x128xf32, #tpu.memory_space<vmem>>) attributes {dimension_semantics = [], scalar_prefetch = 0 : i64, scratch_operands = 0 : i64, tpu.core_type = #tpu.core_type<tc>} {
    %c0 = arith.constant 0 : index
    %c0_0 = arith.constant 0 : index
    %0 = vector.load %arg0[%c0, %c0_0] : memref<32x32xf32, #tpu.memory_space<vmem>>, vector<32x32xf32>
    %cst = arith.constant dense<0.000000e+00> : vector<32x32xf32>
    %1 = tpu.matmul %0, %0, %cst {dimension_numbers = #tpu.dot_dimension_numbers<[1], [0], [0], [1], [0, 0, 1, 1], [], []>} : vector<32x32xf32>, vector<32x32xf32>, vector<32x32xf32> -> vector<32x32xf32>
    %c0_1 = arith.constant 0 : index
    %c0_2 = arith.constant 0 : index
    %2 = vector.load %arg1[%c0_1, %c0_2] : memref<32x32xf32, #tpu.memory_space<vmem>>, vector<32x32xf32>
    %3 = arith.addf %1, %2 : vector<32x32xf32>
    %c0_3 = arith.constant 0 : index
    %c0_4 = arith.constant 0 : index
    %4 = vector.load %arg2[%c0_3, %c0_4] : memref<32x128xf32, #tpu.memory_space<vmem>>, vector<32x128xf32>
    %cst_5 = arith.constant dense<0.000000e+00> : vector<32x128xf32>
    %5 = tpu.matmul %3, %4, %cst_5 {dimension_numbers = #tpu.dot_dimension_numbers<[1], [0], [0], [1], [0, 0, 1, 1], [], []>} : vector<32x32xf32>, vector<32x128xf32>, vector<32x128xf32> -> vector<32x128xf32>
    %c0_6 = arith.constant 0 : index
    %c0_7 = arith.constant 0 : index
    %6 = vector.load %arg3[%c0_6, %c0_7] : memref<32x128xf32, #tpu.memory_space<vmem>>, vector<32x128xf32>
    tpu.vector_store %arg3[%c0_6, %c0_7], %5 {strides = array<i32>} : memref<32x128xf32, #tpu.memory_space<vmem>>, vector<32x128xf32>,
    return
  }
}

</mosaic_0001>

<llo_original>
// kernel: tpu_custom_call.1
$region0: #{tpu_custom_call.1}
  #allocation0 [shape = 'u32[]', space=smem, size = 0x4, offset = 0x4, fixed_abs, tag = 'smem constant byte address 0x4 - core index']
  #allocation1 [shape = 'u32[144,128]{1,0:T(1,128)}', space=vmem, size = 0x12000, scoped, tag = 'internal scratch']
  %s0 = inlined_call_operand.hbm [shape: f32[32,32], index: 0, kind: input, shape index: {}]
  %s1 = inlined_call_operand.hbm [shape: f32[32,32], index: 1, kind: input, shape index: {}]
  %s2 = inlined_call_operand.hbm [shape: f32[32,128], index: 2, kind: input, shape index: {}]
  %s3 = inlined_call_operand.hbm [shape: f32[32,128], index: 3, kind: output, shape index: {}]
  %s4 = sld [smem:[#allocation0]]
  $region34: #{tpu_custom_call.1} parent=0
    _
  %s6 = ssub.s32 1, %s4
  %s7 = scalar_select 0, %s6, %s4
  $region1: #{tpu_custom_call.1} parent=0
    #allocation2 [shape = 'u8[16384]{0}', space=vmem, size = 0x4000, scoped, tag = 'input window, operand 0, single buffered']
    #allocation3 [shape = 's32[1]{0}', space=sflag, size = 0x4, scoped, tag = 'scoped memory for tpu_custom_call.1']
    #allocation4 [shape = 's32[1]{0}', space=sflag, size = 0x4, scoped, tag = 'scoped memory for tpu_custom_call.1']
    #allocation5 [shape = 'u8[16384]{0}', space=vmem, size = 0x4000, scoped, tag = 'input window, operand 1, single buffered']
    #allocation6 [shape = 's32[1]{0}', space=sflag, size = 0x4, scoped, tag = 'scoped memory for tpu_custom_call.1']
    #allocation7 [shape = 'u8[16384]{0}', space=vmem, size = 0x4000, scoped, tag = 'input window, operand 2, single buffered']
    #allocation8 [shape = 'u8[16384]{0}', space=vmem, size = 0x4000, scoped, tag = 'output window, operand 0, single buffered']
    %8 = vsyncpa [#allocation3], 0
    %9 = vsyncpa [#allocation6], 0
    %10 = vsyncpa [#allocation4], 0
    // Predicated region
    $region2: #{tpu_custom_call.1} parent=1 // pred_check
      _
    $region3: #{tpu_custom_call.1} parent=1 // pred_check_branch
      %12 = sbr.rel (0) target = $region5
    $region4: #{tpu_custom_call.1} parent=1 // pred_region
      %s14 = ssub.s32 512, 512
      %15 = vsyncadd [#allocation3], %s14
      %s16 = sshll.u32 [#allocation2], 4
      %s17 = int_to_ptr.vmem [resolvable:$true] %s16
      %22 = dma.hbm_to_vmem [thread:$0]  %s0, 512, %s17, [#allocation3], 128, 128, 8
    $region5: #{tpu_custom_call.1} parent=1 // pred_fallthru
      _
    // Predicated region
    $region6: #{tpu_custom_call.1} parent=1 // pred_check
      _
    $region7: #{tpu_custom_call.1} parent=1 // pred_check_branch
      %24 = sbr.rel (0) target = $region9
    $region8: #{tpu_custom_call.1} parent=1 // pred_region
      %s26 = ssub.s32 512, 512
      %27 = vsyncadd [#allocation6], %s26
      %s28 = sshll.u32 [#allocation5], 4
      %s29 = int_to_ptr.vmem [resolvable:$true] %s28
      %34 = dma.hbm_to_vmem [thread:$0]  %s1, 512, %s29, [#allocation6], 128, 128, 8
    $region9: #{tpu_custom_call.1} parent=1 // pred_fallthru
      _
    // Predicated region
    $region10: #{tpu_custom_call.1} parent=1 // pred_check
      _
    $region11: #{tpu_custom_call.1} parent=1 // pred_check_branch
      %36 = sbr.rel (0) target = $region13
    $region12: #{tpu_custom_call.1} parent=1 // pred_region
      %s38 = ssub.s32 512, 512
      %39 = vsyncadd [#allocation6], %s38
      %s40 = sshll.u32 [#allocation7], 4
      %s41 = int_to_ptr.vmem [resolvable:$true] %s40
      %46 = dma.hbm_to_vmem [thread:$0]  %s2, 512, %s41, [#allocation6], 128, 128, 8
    $region13: #{tpu_custom_call.1} parent=1 // pred_fallthru
      _
    // Predicated region
    $region14: #{tpu_custom_call.1} parent=1 // pred_check
      _
    $region15: #{tpu_custom_call.1} parent=1 // pred_check_branch
      %48 = sbr.rel (0) target = $region17
    $region16: #{tpu_custom_call.1} parent=1 // pred_region
      %49 = dma.done [#allocation3], 512
    $region17: #{tpu_custom_call.1} parent=1 // pred_fallthru
      _
    // Predicated region
    $region18: #{tpu_custom_call.1} parent=1 // pred_check
      _
    $region19: #{tpu_custom_call.1} parent=1 // pred_check_branch
      %51 = sbr.rel (0) target = $region21
    $region20: #{tpu_custom_call.1} parent=1 // pred_region
      %52 = dma.done [#allocation6], 512
    $region21: #{tpu_custom_call.1} parent=1 // pred_fallthru
      _
    // Predicated region
    $region22: #{tpu_custom_call.1} parent=1 // pred_check
      _
    $region23: #{tpu_custom_call.1} parent=1 // pred_check_branch
      %54 = sbr.rel (0) target = $region25
    $region24: #{tpu_custom_call.1} parent=1 // pred_region
      %55 = dma.done [#allocation6], 512
    $region25: #{tpu_custom_call.1} parent=1 // pred_fallthru
      _
    %v56 = vld [vmem:[#allocation2] sm:$0xff]
    %v57 = vld [vmem:[#allocation2 + $0x8] sm:$0xff]
    %v58 = vld [vmem:[#allocation2 + $0x10] sm:$0xff]
    %v59 = vld [vmem:[#allocation2 + $0x18] sm:$0xff]
    %v60 = vld [vmem:[#allocation5] sm:$0xff]
    %v61 = vld [vmem:[#allocation5 + $0x8] sm:$0xff]
    %v62 = vld [vmem:[#allocation5 + $0x10] sm:$0xff]
    %v63 = vld [vmem:[#allocation5 + $0x18] sm:$0xff]
    %vm64 = vcmask 261120
    %v66 = vsel %vm64, %v56, 0
    %v69 = vsel %vm64, %v57, 0
    %v72 = vsel %vm64, %v58, 0
    %v75 = vsel %vm64, %v59, 0
    %77 = vmatprep.subr.mxu0 0.0
    %78 = vmatpush1.msra.mxu0 0.0
    %79 = vmatprep.subr.mxu0 0.0
    %80 = vmatpush1.msra.mxu0 0.0
    %81 = vmatprep.subr.mxu0 0.0
    %82 = vmatpush1.msra.mxu0 0.0
    %83 = vmatprep.subr.mxu0 0.0
    %84 = vmatpush1.msra.mxu0 0.0
    %85 = vmatprep.subr.mxu0 0.0
    %86 = vmatpush1.msra.mxu0 0.0
    %87 = vmatprep.subr.mxu0 0.0
    %88 = vmatpush1.msra.mxu0 0.0
    %89 = vmatprep.subr.mxu0 0.0
    %90 = vmatpush1.msra.mxu0 0.0
    %91 = vmatprep.subr.mxu0 0.0
    %92 = vmatpush1.msra.mxu0 0.0
    %93 = vmatprep.subr.mxu0 0.0
    %94 = vmatpush1.msra.mxu0 0.0
    %95 = vmatprep.subr.mxu0 0.0
    %96 = vmatpush1.msra.mxu0 0.0
    %97 = vmatprep.subr.mxu0 0.0
    %98 = vmatpush1.msra.mxu0 0.0
    %99 = vmatprep.subr.mxu0 0.0
    %100 = vmatpush1.msra.mxu0 0.0
    %101 = vmatprep.subr.mxu0 0.0
    %102 = vmatpush1.msra.mxu0 %v59
    %103 = vmatprep.subr.mxu0 0.0
    %104 = vmatpush1.msra.mxu0 %v58
    %105 = vmatprep.subr.mxu0 0.0
    %106 = vmatpush1.msra.mxu0 %v57
    %107 = vmatprep.subr.mxu0 0.0
    %108 = vmatpush1.msra.mxu0 %v56
    %109 = vmatprep.subr.mxu0 0.0
    %110 = vmatpush2.msra.mxu0 0.0
    %111 = vmatprep.subr.mxu0 0.0
    %112 = vmatpush2.msra.mxu0 0.0
    %113 = vmatprep.subr.mxu0 0.0
    %114 = vmatpush2.msra.mxu0 0.0
    %115 = vmatprep.subr.mxu0 0.0
    %116 = vmatpush2.msra.mxu0 0.0
    %117 = vmatprep.subr.mxu0 0.0
    %118 = vmatpush2.msra.mxu0 0.0
    %119 = vmatprep.subr.mxu0 0.0
    %120 = vmatpush2.msra.mxu0 0.0
    %121 = vmatprep.subr.mxu0 0.0
    %122 = vmatpush2.msra.mxu0 0.0
    %123 = vmatprep.subr.mxu0 0.0
    %124 = vmatpush2.msra.mxu0 0.0
    %125 = vmatprep.subr.mxu0 0.0
    %126 = vmatpush2.msra.mxu0 0.0
    %127 = vmatprep.subr.mxu0 0.0
    %128 = vmatpush2.msra.mxu0 0.0
    %129 = vmatprep.subr.mxu0 0.0
    %130 = vmatpush2.msra.mxu0 0.0
    %131 = vmatprep.subr.mxu0 0.0
    %132 = vmatpush2.msra.mxu0 0.0
    %133 = vmatprep.subr.mxu0 0.0
    %134 = vmatpush2.msra.mxu0 0.0
    %135 = vmatprep.subr.mxu0 0.0
    %136 = vmatpush2.msra.mxu0 0.0
    %137 = vmatprep.subr.mxu0 0.0
    %138 = vmatpush2.msra.mxu0 0.0
    %139 = vmatprep.subr.mxu0 0.0
    %140 = vmatpush2.msra.mxu0 0.0
    %141 = vmatprep.mubr.f32.mxu0 0.0
    %142 = vmatmul.mubr.f32.gmra.mxu0 %v66
    %v143 = vpop.f32.mrf.mxu0
    %v144 = vadd.f32 %v60, %v143
    %v145 = vpop.f32.mrf.mxu0
    %146 = vmatprep.mubr.f32.mxu0 0.0
    %147 = vmatmul.mubr.f32.gmra.mxu0 %v69
    %v148 = vpop.f32.mrf.mxu0
    %v149 = vadd.f32 %v61, %v148
    %v150 = vpop.f32.mrf.mxu0
    %151 = vmatprep.mubr.f32.mxu0 0.0
    %152 = vmatmul.mubr.f32.gmra.mxu0 %v72
    %v153 = vpop.f32.mrf.mxu0
    %v154 = vadd.f32 %v62, %v153
    %v155 = vpop.f32.mrf.mxu0
    %156 = vmatprep.mubr.f32.mxu0 0.0
    %157 = vmatmul.mubr.f32.gmra.mxu0 %v75
    %v158 = vpop.f32.mrf.mxu0
    %v159 = vadd.f32 %v63, %v158
    %v160 = vpop.f32.mrf.mxu0
    %161 = vdwg.mxu0
    %v162 = vld [vmem:[#allocation7] sm:$0xff]
    %v163 = vld [vmem:[#allocation7 + $0x8] sm:$0xff]
    %v164 = vld [vmem:[#allocation7 + $0x10] sm:$0xff]
    %v165 = vld [vmem:[#allocation7 + $0x18] sm:$0xff]
    %v167 = vsel %vm64, %v144, 0
    %v170 = vsel %vm64, %v149, 0
    %v173 = vsel %vm64, %v154, 0
    %v176 = vsel %vm64, %v159, 0
    %178 = vmatprep.subr.mxu0 0.0
    %179 = vmatpush1.msra.mxu0 0.0
    %180 = vmatprep.subr.mxu0 0.0
    %181 = vmatpush1.msra.mxu0 0.0
    %182 = vmatprep.subr.mxu0 0.0
    %183 = vmatpush1.msra.mxu0 0.0
    %184 = vmatprep.subr.mxu0 0.0
    %185 = vmatpush1.msra.mxu0 0.0
    %186 = vmatprep.subr.mxu0 0.0
    %187 = vmatpush1.msra.mxu0 0.0
    %188 = vmatprep.subr.mxu0 0.0
    %189 = vmatpush1.msra.mxu0 0.0
    %190 = vmatprep.subr.mxu0 0.0
    %191 = vmatpush1.msra.mxu0 0.0
    %192 = vmatprep.subr.mxu0 0.0
    %193 = vmatpush1.msra.mxu0 0.0
    %194 = vmatprep.subr.mxu0 0.0
    %195 = vmatpush1.msra.mxu0 0.0
    %196 = vmatprep.subr.mxu0 0.0
    %197 = vmatpush1.msra.mxu0 0.0
    %198 = vmatprep.subr.mxu0 0.0
    %199 = vmatpush1.msra.mxu0 0.0
    %200 = vmatprep.subr.mxu0 0.0
    %201 = vmatpush1.msra.mxu0 0.0
    %202 = vmatprep.subr.mxu0 0.0
    %203 = vmatpush1.msra.mxu0 %v165
    %204 = vmatprep.subr.mxu0 0.0
    %205 = vmatpush1.msra.mxu0 %v164
    %206 = vmatprep.subr.mxu0 0.0
    %207 = vmatpush1.msra.mxu0 %v163
    %208 = vmatprep.subr.mxu0 0.0
    %209 = vmatpush1.msra.mxu0 %v162
    %210 = vmatprep.subr.mxu0 0.0
    %211 = vmatpush2.msra.mxu0 0.0
    %212 = vmatprep.subr.mxu0 0.0
    %213 = vmatpush2.msra.mxu0 0.0
    %214 = vmatprep.subr.mxu0 0.0
    %215 = vmatpush2.msra.mxu0 0.0
    %216 = vmatprep.subr.mxu0 0.0
    %217 = vmatpush2.msra.mxu0 0.0
    %218 = vmatprep.subr.mxu0 0.0
    %219 = vmatpush2.msra.mxu0 0.0
    %220 = vmatprep.subr.mxu0 0.0
    %221 = vmatpush2.msra.mxu0 0.0
    %222 = vmatprep.subr.mxu0 0.0
    %223 = vmatpush2.msra.mxu0 0.0
    %224 = vmatprep.subr.mxu0 0.0
    %225 = vmatpush2.msra.mxu0 0.0
    %226 = vmatprep.subr.mxu0 0.0
    %227 = vmatpush2.msra.mxu0 0.0
    %228 = vmatprep.subr.mxu0 0.0
    %229 = vmatpush2.msra.mxu0 0.0
    %230 = vmatprep.subr.mxu0 0.0
    %231 = vmatpush2.msra.mxu0 0.0
    %232 = vmatprep.subr.mxu0 0.0
    %233 = vmatpush2.msra.mxu0 0.0
    %234 = vmatprep.subr.mxu0 0.0
    %235 = vmatpush2.msra.mxu0 0.0
    %236 = vmatprep.subr.mxu0 0.0
    %237 = vmatpush2.msra.mxu0 0.0
    %238 = vmatprep.subr.mxu0 0.0
    %239 = vmatpush2.msra.mxu0 0.0
    %240 = vmatprep.subr.mxu0 0.0
    %241 = vmatpush2.msra.mxu0 0.0
    %242 = vmatprep.mubr.f32.mxu0 0.0
    %243 = vmatmul.mubr.f32.gmra.mxu0 %v167
    %v244 = vpop.f32.mrf.mxu0
    %v245 = vadd.f32 0.0, %v244
    %v246 = vpop.f32.mrf.mxu0
    %247 = vmatprep.mubr.f32.mxu0 0.0
    %248 = vmatmul.mubr.f32.gmra.mxu0 %v170
    %v249 = vpop.f32.mrf.mxu0
    %v250 = vadd.f32 0.0, %v249
    %v251 = vpop.f32.mrf.mxu0
    %252 = vmatprep.mubr.f32.mxu0 0.0
    %253 = vmatmul.mubr.f32.gmra.mxu0 %v173
    %v254 = vpop.f32.mrf.mxu0
    %v255 = vadd.f32 0.0, %v254
    %v256 = vpop.f32.mrf.mxu0
    %257 = vmatprep.mubr.f32.mxu0 0.0
    %258 = vmatmul.mubr.f32.gmra.mxu0 %v176
    %v259 = vpop.f32.mrf.mxu0
    %v260 = vadd.f32 0.0, %v259
    %v261 = vpop.f32.mrf.mxu0
    %262 = vdwg.mxu0
    %263 = vst [vmem:[#allocation8] sm:$0xff] %v245
    %264 = vst [vmem:[#allocation8 + $0x8] sm:$0xff] %v250
    %265 = vst [vmem:[#allocation8 + $0x10] sm:$0xff] %v255
    %266 = vst [vmem:[#allocation8 + $0x18] sm:$0xff] %v260
    // Predicated region
    $region26: #{tpu_custom_call.1} parent=1 // pred_check
      _
    $region27: #{tpu_custom_call.1} parent=1 // pred_check_branch
      %268 = sbr.rel (0) target = $region29
    $region28: #{tpu_custom_call.1} parent=1 // pred_region
      %s270 = ssub.s32 512, 512
      %271 = vsyncadd [#allocation4], %s270
      %s272 = sshll.u32 [#allocation8], 4
      %s273 = int_to_ptr.vmem [resolvable:$true] %s272
      %278 = dma.vmem_to_hbm [thread:$0]  %s273, 512, %s3, [#allocation4], 128, 128, 8
    $region29: #{tpu_custom_call.1} parent=1 // pred_fallthru
      _
    // Predicated region
    $region30: #{tpu_custom_call.1} parent=1 // pred_check
      _
    $region31: #{tpu_custom_call.1} parent=1 // pred_check_branch
      %280 = sbr.rel (0) target = $region33
    $region32: #{tpu_custom_call.1} parent=1 // pred_region
      %281 = dma.done [#allocation4], 512
    $region33: #{tpu_custom_call.1} parent=1 // pred_fallthru
      _
    %282 = vsyncpa [#allocation3], 1
    %283 = vsyncpa [#allocation6], 1
    %284 = vsyncpa [#allocation4], 1

</llo_original>
